<compile_context>
chip_gen: v5e
topology: v5e:2x2
jax: 0.10.0
libtpu: 0.0.40
codegen_flags: <defaults>
</compile_context>

<pallas_src>
import functools

import jax
import jax.numpy as jnp
from jax.experimental import pallas as pl
from jax.experimental.pallas import tpu as pltpu


def _qa_head_kernel(hidden_ref, w1_ref, b1_ref, w2_ref, b2_ref, out_ref,
                    acc_ref, *, seq_len):
    """Mean-pool over sequence (accumulated across grid axis 1), then
    Linear+ReLU, Linear -> logits in the final-step epilogue.

    hidden_ref : (TB, TS, D) in VMEM (f32 or bf16)
    w1_ref     : (D, D)
    b1_ref     : (1, D)
    w2_ref     : (D, 2)
    b2_ref     : (1, 2)
    out_ref    : (TB, 2)
    acc_ref    : (TB, D) f32 scratch, persistent across the sequence axis
    """
    s = pl.program_id(1)

    @pl.when(s == 0)
    def _init():
        acc_ref[...] = jnp.zeros_like(acc_ref)

    # Partial sequence sum: reduce over the S axis of the tile.  D stays on the
    # lane axis.  Accumulate in f32 even if the hidden stream is bf16.  This is
    # tiny compared to the HBM stream and hides under the DMA pipeline.
    tile = hidden_ref[...].astype(jnp.float32)            # (TB, TS, D)
    acc_ref[...] += jnp.sum(tile, axis=1)                 # (TB, D)

    @pl.when(s == pl.num_programs(1) - 1)
    def _epilogue():
        pooled = acc_ref[...] * (1.0 / seq_len)           # mean over full S

        # pooled = relu(linear_layer(pooled))
        h = jnp.dot(pooled, w1_ref[...].astype(jnp.float32),
                    preferred_element_type=jnp.float32)
        h = h + b1_ref[...].astype(jnp.float32)
        h = jnp.maximum(h, 0.0)

        # logits = classifier(h)
        logits = jnp.dot(h, w2_ref[...].astype(jnp.float32),
                         preferred_element_type=jnp.float32)
        logits = logits + b2_ref[...].astype(jnp.float32)
        out_ref[...] = logits.astype(out_ref.dtype)


def _pick_tile(full, target):
    """Largest divisor of `full` that is <= target and is either a multiple of
    8 (TPU sublane constraint) or the full extent itself."""
    if full <= target:
        return full
    for d in range(target, 0, -1):
        if full % d == 0 and d % 8 == 0:
            return d
    return full  # fall back to full extent (always a legal block size)


def qa_classifier_head(hidden, w1, b1, w2, b2, *, tb_target=8,
                       hidden_tile_budget_bytes=4 << 20):
    """Runs the Pallas kernel for the classifier head.

    hidden : (B, S, D) float32/bfloat16 -- transformer last_hidden_state
    w1     : (D, D)    -- linear_layer weight, (in, out) layout
    b1     : (D,)
    w2     : (D, 2)    -- classifier weight, (in, out) layout
    b2     : (2,)
    returns: (B, 2)    float32 logits
    """
    B, S, D = hidden.shape
    TB = _pick_tile(B, tb_target)   # batch tile (parallel axis)

    # Sequence tile: largest legal tile under the per-buffer VMEM budget so the
    # double-buffered hidden stream fits comfortably everywhere (incl. v7x).
    itemsize = jnp.dtype(hidden.dtype).itemsize
    ts_target = max(8, hidden_tile_budget_bytes // max(1, TB * D * itemsize))
    TS = _pick_tile(S, int(ts_target))  # sequence tile (reduction axis)

    b1_2d = b1.reshape(1, D)
    b2_2d = b2.reshape(1, 2)

    # Scoped VMEM budget: double-buffered hidden tile + (conservatively
    # double-buffered) weights + scratch + output, plus headroom.
    hidden_tile_bytes = TB * TS * D * itemsize
    weight_bytes = (w1.size * jnp.dtype(w1.dtype).itemsize + b1_2d.size * 4
                    + w2.size * jnp.dtype(w2.dtype).itemsize + b2_2d.size * 4)
    scratch_bytes = TB * D * 4
    out_bytes = TB * 2 * 4
    vmem_limit = (2 * hidden_tile_bytes + 2 * weight_bytes
                  + scratch_bytes + 2 * out_bytes + (4 << 20))
    vmem_limit = int(max(vmem_limit, 16 << 20))
    vmem_limit = int(min(vmem_limit, 64 << 20))   # legal on v7x's 64 MiB VMEM

    kernel = functools.partial(_qa_head_kernel, seq_len=S)

    out = pl.pallas_call(
        kernel,
        out_shape=jax.ShapeDtypeStruct((B, 2), jnp.float32),
        grid=(B // TB, S // TS),
        in_specs=[
            # hidden: streamed over (batch, sequence) tiles.
            pl.BlockSpec((TB, TS, D), lambda i, s: (i, s, 0)),
            # weights/biases: constant index_map -> resident across the grid.
            pl.BlockSpec((D, D), lambda i, s: (0, 0)),
            pl.BlockSpec((1, D), lambda i, s: (0, 0)),
            pl.BlockSpec((D, 2), lambda i, s: (0, 0)),
            pl.BlockSpec((1, 2), lambda i, s: (0, 0)),
        ],
        # Same output block across the sequence (reduction) axis -> accumulator
        # pattern; logits written only in the final-step epilogue.
        out_specs=pl.BlockSpec((TB, 2), lambda i, s: (i, 0)),
        scratch_shapes=[pltpu.VMEM((TB, D), jnp.float32)],
        compiler_params=pltpu.CompilerParams(
            dimension_semantics=("parallel", "arbitrary"),
            vmem_limit_bytes=vmem_limit,
        ),
        cost_estimate=pl.CostEstimate(
            flops=B * S * D + 2 * B * D * D + 2 * B * D * 2,
            transcendentals=0,
            bytes_accessed=hidden.size * itemsize
            + w1.size * jnp.dtype(w1.dtype).itemsize + B * 2 * 4,
        ),
    )(hidden, w1, b1_2d, w2, b2_2d)
    return out


def qa_classifier_forward(input_enc, params):
    """Mirrors QAClassifierModel.forward.

    input_enc: dict with 'last_hidden_state' (B, S, D) and optionally
               'is_impossible' (B,) labels.
    Returns (out_logits, is_impossible) like the PyTorch module.
    """
    hidden = input_enc['last_hidden_state']
    out_logits = qa_classifier_head(
        hidden, params['w1'], params['b1'], params['w2'], params['b2'])
    # Use .get (not .pop) to avoid mutating the caller's dict.
    is_impossible = input_enc.get('is_impossible', None)
    if is_impossible is not None:
        # torch.LongTensor -> integer labels (int32 on TPU/JAX)
        is_impossible = jnp.asarray(is_impossible, dtype=jnp.int32)
    return out_logits, is_impossible


def _reference_forward(hidden, params):
    """Pure-JAX reference for correctness checking."""
    pooled = jnp.mean(hidden.astype(jnp.float32), axis=1)
    h = jnp.maximum(pooled @ params['w1'] + params['b1'], 0.0)
    return h @ params['w2'] + params['b2']


if __name__ == "__main__":
    # Small shapes consistent with the module: batch=2, seq=8, embed_dim=32.
    B, S, D = 2, 8, 32
    key = jax.random.PRNGKey(0)
    k_h, k_w1, k_b1, k_w2, k_b2 = jax.random.split(key, 5)

    # Synthetic transformer output (stand-in for last_hidden_state).
    hidden = jax.random.normal(k_h, (B, S, D), dtype=jnp.float32)

    # Deterministic parameter init (shapes from nn.Linear(D, D), nn.Linear(D, 2)),
    # stored in (in, out) layout so the kernel computes x @ W + b.
    params = {
        'w1': jax.random.normal(k_w1, (D, D), dtype=jnp.float32) * 0.05,
        'b1': jax.random.normal(k_b1, (D,), dtype=jnp.float32) * 0.05,
        'w2': jax.random.normal(k_w2, (D, 2), dtype=jnp.float32) * 0.05,
        'b2': jax.random.normal(k_b2, (2,), dtype=jnp.float32) * 0.05,
    }

    input_enc = {
        'last_hidden_state': hidden,
        'is_impossible': jnp.array([0, 1]),
    }

    out_logits, is_impossible = qa_classifier_forward(input_enc, params)
    out_logits = jax.block_until_ready(out_logits)

    # Correctness check against pure-JAX reference.
    ref = _reference_forward(hidden, params)
    assert out_logits.shape == (B, 2)
    assert is_impossible is not None and is_impossible.dtype == jnp.int32
    assert jnp.allclose(out_logits, ref, atol=1e-5, rtol=1e-5)

    # Larger sanity run exercising the multi-tile (pipelined) path, incl. a
    # bf16 hidden stream with f32 accumulation.
    B2, S2, D2 = 16, 512, 128
    kh2, kw1, kb1, kw2, kb2 = jax.random.split(jax.random.PRNGKey(1), 5)
    hidden2 = jax.random.normal(kh2, (B2, S2, D2), dtype=jnp.float32)
    params2 = {
        'w1': jax.random.normal(kw1, (D2, D2), dtype=jnp.float32) * 0.05,
        'b1': jax.random.normal(kb1, (D2,), dtype=jnp.float32) * 0.05,
        'w2': jax.random.normal(kw2, (D2, 2), dtype=jnp.float32) * 0.05,
        'b2': jax.random.normal(kb2, (2,), dtype=jnp.float32) * 0.05,
    }
    out2 = qa_classifier_head(
        hidden2.astype(jnp.bfloat16),
        w1=params2['w1'], b1=params2['b1'],
        w2=params2['w2'], b2=params2['b2'])
    out2 = jax.block_until_ready(out2)
    ref2 = _reference_forward(hidden2.astype(jnp.bfloat16), params2)
    assert out2.shape == (B2, 2)
    assert jnp.allclose(out2, ref2, atol=5e-2, rtol=5e-2)

    print("KERNEL_OK")
</pallas_src>

<mosaic_0001>
module attributes {stable_mosaic.version = 11 : i64} {
  func.func @_qa_head_kernel(%arg0: i32, %arg1: i32, %arg2: memref<2x8x32xf32, #tpu.memory_space<vmem>>, %arg3: memref<32x32xf32, #tpu.memory_space<vmem>>, %arg4: memref<1x32xf32, #tpu.memory_space<vmem>>, %arg5: memref<32x2xf32, #tpu.memory_space<vmem>>, %arg6: memref<1x2xf32, #tpu.memory_space<vmem>>, %arg7: memref<2x2xf32, #tpu.memory_space<vmem>>, %arg8: memref<2x32xf32, #tpu.memory_space<vmem>>) attributes {dimension_semantics = [#tpu.dimension_semantics<parallel>, #tpu.dimension_semantics<arbitrary>], iteration_bounds = array<i64: 1, 1>, scalar_prefetch = 0 : i64, scratch_operands = 1 : i64, tpu.core_type = #tpu.core_type<tc>, window_params = [{transform_indices = @transform_0, window_bounds = array<i64: 2, 8, 32>}, {pipeline_mode = #tpu.pipeline_mode<synchronous>, transform_indices = @transform_1, window_bounds = array<i64: 32, 32>}, {pipeline_mode = #tpu.pipeline_mode<synchronous>, transform_indices = @transform_2, window_bounds = array<i64: 1, 32>}, {pipeline_mode = #tpu.pipeline_mode<synchronous>, transform_indices = @transform_3, window_bounds = array<i64: 32, 2>}, {pipeline_mode = #tpu.pipeline_mode<synchronous>, transform_indices = @transform_4, window_bounds = array<i64: 1, 2>}, {transform_indices = @transform_5, window_bounds = array<i64: 2, 2>}]} {
    %c0_i32 = arith.constant 0 : i32
    %0 = arith.cmpi eq, %arg1, %c0_i32 : i32
    %1 = arith.extui %0 : i1 to i32
    %c0_i32_0 = arith.constant 0 : i32
    %2 = arith.cmpi ne, %1, %c0_i32_0 : i32
    scf.if %2 {
      %cst_9 = arith.constant 0.000000e+00 : f32
      %11 = vector.broadcast %cst_9 : f32 to vector<2x32xf32>
      %c0_10 = arith.constant 0 : index
      %c0_11 = arith.constant 0 : index
      %12 = vector.load %arg8[%c0_10, %c0_11] : memref<2x32xf32, #tpu.memory_space<vmem>>, vector<2x32xf32>
      tpu.vector_store %arg8[%c0_10, %c0_11], %11 {strides = array<i32>} : memref<2x32xf32, #tpu.memory_space<vmem>>, vector<2x32xf32>,
    } else {
    }
    %c0 = arith.constant 0 : index
    %c0_1 = arith.constant 0 : index
    %c0_2 = arith.constant 0 : index
    %3 = vector.load %arg2[%c0, %c0_1, %c0_2] : memref<2x8x32xf32, #tpu.memory_space<vmem>>, vector<2x8x32xf32>
    %c0_3 = arith.constant 0 : index
    %c0_4 = arith.constant 0 : index
    %4 = vector.load %arg8[%c0_3, %c0_4] : memref<2x32xf32, #tpu.memory_space<vmem>>, vector<2x32xf32>
    %cst = arith.constant dense<0.000000e+00> : vector<2x32xf32>
    %5 = vector.multi_reduction <add>, %3, %cst [1] : vector<2x8x32xf32> to vector<2x32xf32>
    %6 = arith.addf %4, %5 : vector<2x32xf32>
    %c0_5 = arith.constant 0 : index
    %c0_6 = arith.constant 0 : index
    %7 = vector.load %arg8[%c0_5, %c0_6] : memref<2x32xf32, #tpu.memory_space<vmem>>, vector<2x32xf32>
    tpu.vector_store %arg8[%c0_5, %c0_6], %6 {strides = array<i32>} : memref<2x32xf32, #tpu.memory_space<vmem>>, vector<2x32xf32>,
    %c0_i32_7 = arith.constant 0 : i32
    %8 = arith.cmpi eq, %arg1, %c0_i32_7 : i32
    %9 = arith.extui %8 : i1 to i32
    %c0_i32_8 = arith.constant 0 : i32
    %10 = arith.cmpi ne, %9, %c0_i32_8 : i32
    scf.if %10 {
      %c0_9 = arith.constant 0 : index
      %c0_10 = arith.constant 0 : index
      %11 = vector.load %arg8[%c0_9, %c0_10] : memref<2x32xf32, #tpu.memory_space<vmem>>, vector<2x32xf32>
      %cst_11 = arith.constant 1.250000e-01 : f32
      %12 = vector.broadcast %cst_11 : f32 to vector<2x32xf32>
      %13 = arith.mulf %11, %12 : vector<2x32xf32>
      %c0_12 = arith.constant 0 : index
      %c0_13 = arith.constant 0 : index
      %14 = vector.load %arg3[%c0_12, %c0_13] : memref<32x32xf32, #tpu.memory_space<vmem>>, vector<32x32xf32>
      %cst_14 = arith.constant dense<0.000000e+00> : vector<2x32xf32>
      %15 = tpu.matmul %13, %14, %cst_14 {dimension_numbers = #tpu.dot_dimension_numbers<[1], [0], [0], [1], [0, 0, 1, 1], [], []>} : vector<2x32xf32>, vector<32x32xf32>, vector<2x32xf32> -> vector<2x32xf32>
      %c0_15 = arith.constant 0 : index
      %c0_16 = arith.constant 0 : index
      %16 = vector.load %arg4[%c0_15, %c0_16] : memref<1x32xf32, #tpu.memory_space<vmem>>, vector<1x32xf32>
      %17 = vector.broadcast %16 : vector<1x32xf32> to vector<2x32xf32>
      %18 = arith.addf %15, %17 : vector<2x32xf32>
      %cst_17 = arith.constant 0.000000e+00 : f32
      %19 = vector.broadcast %cst_17 : f32 to vector<2x32xf32>
      %20 = arith.maximumf %18, %19 : vector<2x32xf32>
      %c0_18 = arith.constant 0 : index
      %c0_19 = arith.constant 0 : index
      %21 = vector.load %arg5[%c0_18, %c0_19] : memref<32x2xf32, #tpu.memory_space<vmem>>, vector<32x2xf32>
      %cst_20 = arith.constant dense<0.000000e+00> : vector<2x2xf32>
      %22 = tpu.matmul %20, %21, %cst_20 {dimension_numbers = #tpu.dot_dimension_numbers<[1], [0], [0], [1], [0, 0, 1, 1], [], []>} : vector<2x32xf32>, vector<32x2xf32>, vector<2x2xf32> -> vector<2x2xf32>
      %c0_21 = arith.constant 0 : index
      %c0_22 = arith.constant 0 : index
      %23 = vector.load %arg6[%c0_21, %c0_22] : memref<1x2xf32, #tpu.memory_space<vmem>>, vector<1x2xf32>
      %24 = vector.broadcast %23 : vector<1x2xf32> to vector<2x2xf32>
      %25 = arith.addf %22, %24 : vector<2x2xf32>
      %c0_23 = arith.constant 0 : index
      %c0_24 = arith.constant 0 : index
      %26 = vector.load %arg7[%c0_23, %c0_24] : memref<2x2xf32, #tpu.memory_space<vmem>>, vector<2x2xf32>
      tpu.vector_store %arg7[%c0_23, %c0_24], %25 {strides = array<i32>} : memref<2x2xf32, #tpu.memory_space<vmem>>, vector<2x2xf32>,
    } else {
    }
    return
  }
  func.func @transform_0(%arg0: i32, %arg1: i32) -> (i32, i32, i32) {
    %c0_i32 = arith.constant 0 : i32
    %c0_i32_0 = arith.constant 0 : i32
    return %arg0, %arg1, %c0_i32 : i32, i32, i32
  }
  func.func @transform_1(%arg0: i32, %arg1: i32) -> (i32, i32) {
    %c0_i32 = arith.constant 0 : i32
    %c0_i32_0 = arith.constant 0 : i32
    %c0_i32_1 = arith.constant 0 : i32
    return %c0_i32, %c0_i32_0 : i32, i32
  }
  func.func @transform_2(%arg0: i32, %arg1: i32) -> (i32, i32) {
    %c0_i32 = arith.constant 0 : i32
    %c0_i32_0 = arith.constant 0 : i32
    %c0_i32_1 = arith.constant 0 : i32
    return %c0_i32, %c0_i32_0 : i32, i32
  }
  func.func @transform_3(%arg0: i32, %arg1: i32) -> (i32, i32) {
    %c0_i32 = arith.constant 0 : i32
    %c0_i32_0 = arith.constant 0 : i32
    %c0_i32_1 = arith.constant 0 : i32
    return %c0_i32, %c0_i32_0 : i32, i32
  }
  func.func @transform_4(%arg0: i32, %arg1: i32) -> (i32, i32) {
    %c0_i32 = arith.constant 0 : i32
    %c0_i32_0 = arith.constant 0 : i32
    %c0_i32_1 = arith.constant 0 : i32
    return %c0_i32, %c0_i32_0 : i32, i32
  }
  func.func @transform_5(%arg0: i32, %arg1: i32) -> (i32, i32) {
    %c0_i32 = arith.constant 0 : i32
    %c0_i32_0 = arith.constant 0 : i32
    return %arg0, %c0_i32 : i32, i32
  }
}

</mosaic_0001>

<llo_original>
// kernel: tpu_custom_call.1
$region0: #{tpu_custom_call.1}
  #allocation0 [shape = 'u32[]', space=smem, size = 0x4, offset = 0x4, fixed_abs, tag = 'smem constant byte address 0x4 - core index']
  #allocation1 [shape = 'u32[72,128]{1,0:T(1,128)}', space=vmem, size = 0x9000, scoped, tag = 'internal scratch']
  #allocation2 [shape = 'f32[2,32]{1,0:T(2,128)}', space=vmem, size = 0x400, scoped, tag = 'scratch operand']
  %s0 = inlined_call_operand.hbm [shape: f32[2,8,32], index: 0, kind: input, shape index: {}]
  %s1 = inlined_call_operand.vmem [shape: f32[32,32], index: 1, kind: input, shape index: {}]
  %s2 = inlined_call_operand.vmem [shape: f32[1,32], index: 2, kind: input, shape index: {}]
  %s3 = inlined_call_operand.vmem [shape: f32[32,2], index: 3, kind: input, shape index: {}]
  %s4 = inlined_call_operand.vmem [shape: f32[1,2], index: 4, kind: input, shape index: {}]
  %s5 = inlined_call_operand.hbm [shape: f32[2,2], index: 5, kind: output, shape index: {}]
  %s6 = sld [smem:[#allocation0]]
  $region42: #{tpu_custom_call.1} parent=0
    _
  %s8 = ssub.s32 1, %s6
  %s9 = scalar_select 0, %s8, %s6
  $region1: #{tpu_custom_call.1} parent=0
    #allocation3 [shape = 'u8[8192]{0}', space=vmem, size = 0x2000, scoped, tag = 'input window, operand 0, single buffered']
    #allocation4 [shape = 's32[1]{0}', space=sflag, size = 0x4, scoped, tag = 'scoped memory for tpu_custom_call.1']
    #allocation5 [shape = 's32[1]{0}', space=sflag, size = 0x4, scoped, tag = 'scoped memory for tpu_custom_call.1']
    #allocation6 [shape = 'u8[1024]{0}', space=vmem, size = 0x400, scoped, tag = 'output window, operand 0, single buffered']
    %10 = vsyncpa [#allocation4], 0
    %11 = vsyncpa [#allocation5], 0
    // Predicated region
    $region2: #{tpu_custom_call.1} parent=1 // pred_check
      _
    $region3: #{tpu_custom_call.1} parent=1 // pred_check_branch
      %13 = sbr.rel (0) target = $region5
    $region4: #{tpu_custom_call.1} parent=1 // pred_region
      %15 = vsyncadd [#allocation4], 0
      %s16 = sshll.u32 %s0, 4
      %s17 = int_to_ptr.hbm [resolvable:$true] %s16
      %s18 = sshll.u32 [#allocation3], 4
      %s19 = int_to_ptr.vmem [resolvable:$true] %s18
      %24 = dma.hbm_to_vmem [thread:$0]  %s17, 256, %s19, [#allocation4], 128, 128, 8
    $region5: #{tpu_custom_call.1} parent=1 // pred_fallthru
      _
    // Predicated region
    $region6: #{tpu_custom_call.1} parent=1 // pred_check
      _
    $region7: #{tpu_custom_call.1} parent=1 // pred_check_branch
      %26 = sbr.rel (0) target = $region9
    $region8: #{tpu_custom_call.1} parent=1 // pred_region
      _
    $region9: #{tpu_custom_call.1} parent=1 // pred_fallthru
      _
    // Predicated region
    $region10: #{tpu_custom_call.1} parent=1 // pred_check
      _
    $region11: #{tpu_custom_call.1} parent=1 // pred_check_branch
      %28 = sbr.rel (0) target = $region13
    $region12: #{tpu_custom_call.1} parent=1 // pred_region
      _
    $region13: #{tpu_custom_call.1} parent=1 // pred_fallthru
      _
    // Predicated region
    $region14: #{tpu_custom_call.1} parent=1 // pred_check
      _
    $region15: #{tpu_custom_call.1} parent=1 // pred_check_branch
      %30 = sbr.rel (0) target = $region17
    $region16: #{tpu_custom_call.1} parent=1 // pred_region
      _
    $region17: #{tpu_custom_call.1} parent=1 // pred_fallthru
      _
    // Predicated region
    $region18: #{tpu_custom_call.1} parent=1 // pred_check
      _
    $region19: #{tpu_custom_call.1} parent=1 // pred_check_branch
      %32 = sbr.rel (0) target = $region21
    $region20: #{tpu_custom_call.1} parent=1 // pred_region
      _
    $region21: #{tpu_custom_call.1} parent=1 // pred_fallthru
      _
    // Predicated region
    $region22: #{tpu_custom_call.1} parent=1 // pred_check
      _
    $region23: #{tpu_custom_call.1} parent=1 // pred_check_branch
      %34 = sbr.rel (0) target = $region25
    $region24: #{tpu_custom_call.1} parent=1 // pred_region
      %36 = dma.done [#allocation4], 256
    $region25: #{tpu_custom_call.1} parent=1 // pred_fallthru
      _
    %p37 = scmp.eq.s32.totalorder 0, 0
    // Predicated region
    $region26: #{tpu_custom_call.1} parent=1 // pred_check
      %p38 = pneg %p37
    $region27: #{tpu_custom_call.1} parent=1 // pred_check_branch
      %40 = sbr.rel (%p38) target = $region29
    $region28: #{tpu_custom_call.1} parent=1 // pred_region
      %vm41 = vcmask 254976
      %42 = vst.msk [vmem:[#allocation2] sm:$0x3] %vm41, 0.0
    $region29: #{tpu_custom_call.1} parent=1 // pred_fallthru
      _
    %v43 = vld [vmem:[#allocation3] sm:$0xff]
    %v44 = vld [vmem:[#allocation3 + $0x8] sm:$0xff]
    %v45 = vld [vmem:[#allocation2] sm:$0x3]
    %vm46 = vcmask 261120
    %v47 = vsel %vm46, %v43, 0.0
    %v48 = vrot.slane %v47, 4
    %v49 = vadd.f32 %v47, %v48
    %v50 = vrot.slane %v49, 2
    %v51 = vadd.f32 %v49, %v50
    %v52 = vrot.slane %v51, 1
    %v53 = vadd.f32 %v51, %v52
    %v54 = vsel %vm46, %v44, 0.0
    %v55 = vrot.slane %v54, 4
    %v56 = vadd.f32 %v54, %v55
    %v57 = vrot.slane %v56, 2
    %v58 = vadd.f32 %v56, %v57
    %v59 = vrot.slane %v58, 1
    %v60 = vadd.f32 %v58, %v59
    %vm63 = vcmask 1041409
    %v64 = vsel %vm63, %v60, %v53
    %v66 = vadd.f32 %v45, %v64
    %vm67 = vcmask 254976
    %68 = vst.msk [vmem:[#allocation2] sm:$0x3] %vm67, %v66
    // Predicated region
    $region30: #{tpu_custom_call.1} parent=1 // pred_check
      %p69 = pneg %p37
    $region31: #{tpu_custom_call.1} parent=1 // pred_check_branch
      %71 = sbr.rel (%p69) target = $region33
    $region32: #{tpu_custom_call.1} parent=1 // pred_region
      %v72 = vld [vmem:[#allocation2] sm:$0x3]
      %v73 = vmul.f32 %v72, 0.125
      %v74 = vld [vmem:[%s1] sm:$0xff]
      %v75 = vld [vmem:[%s1 + $0x8] sm:$0xff]
      %v76 = vld [vmem:[%s1 + $0x10] sm:$0xff]
      %v77 = vld [vmem:[%s1 + $0x18] sm:$0xff]
      %v78 = vld [vmem:[%s2] sm:$0x1]
      %v80 = vperm.slane %v78, 0
      %v83 = vsel %vm46, %v73, 0
      %85 = vmatpush.msra.mxu0 0.0
      %86 = vmatpush.msra.mxu0 0.0
      %87 = vmatpush.msra.mxu0 0.0
      %88 = vmatpush.msra.mxu0 0.0
      %89 = vmatpush.msra.mxu0 0.0
      %90 = vmatpush.msra.mxu0 0.0
      %91 = vmatpush.msra.mxu0 0.0
      %92 = vmatpush.msra.mxu0 0.0
      %93 = vmatpush.msra.mxu0 0.0
      %94 = vmatpush.msra.mxu0 0.0
      %95 = vmatpush.msra.mxu0 0.0
      %96 = vmatpush.msra.mxu0 0.0
      %97 = vmatpush.msra.mxu0 %v77
      %98 = vmatpush.msra.mxu0 %v76
      %99 = vmatpush.msra.mxu0 %v75
      %100 = vmatpush.msra.mxu0 %v74
      %101 = vmatmul.f32.gmra.mxu0 %v83
      %v102 = vpop.f32.mrf.mxu0
      %v103 = vadd.f32 %v80, %v102
      %104 = vdwg.mxu0
      %v105 = vmax.f32 %v103, 0.0
      %v106 = vld [vmem:[%s3] sm:$0xff]
      %v107 = vld [vmem:[%s3 + $0x8] sm:$0xff]
      %v108 = vld [vmem:[%s3 + $0x10] sm:$0xff]
      %v109 = vld [vmem:[%s3 + $0x18] sm:$0xff]
      %v110 = vld [vmem:[%s4] sm:$0x1]
      %v112 = vperm.slane %v110, 0
      %v115 = vsel %vm46, %v105, 0
      %117 = vmatpush.msra.mxu0 0.0
      %118 = vmatpush.msra.mxu0 0.0
      %119 = vmatpush.msra.mxu0 0.0
      %120 = vmatpush.msra.mxu0 0.0
      %121 = vmatpush.msra.mxu0 0.0
      %122 = vmatpush.msra.mxu0 0.0
      %123 = vmatpush.msra.mxu0 0.0
      %124 = vmatpush.msra.mxu0 0.0
      %125 = vmatpush.msra.mxu0 0.0
      %126 = vmatpush.msra.mxu0 0.0
      %127 = vmatpush.msra.mxu0 0.0
      %128 = vmatpush.msra.mxu0 0.0
      %129 = vmatpush.msra.mxu0 %v109
      %130 = vmatpush.msra.mxu0 %v108
      %131 = vmatpush.msra.mxu0 %v107
      %132 = vmatpush.msra.mxu0 %v106
      %133 = vmatmul.f32.gmra.mxu0 %v115
      %v134 = vpop.f32.mrf.mxu0
      %v135 = vadd.f32 %v112, %v134
      %136 = vdwg.mxu0
      %vm137 = vcmask 9216
      %138 = vst.msk [vmem:[#allocation6] sm:$0x3] %vm137, %v135
    $region33: #{tpu_custom_call.1} parent=1 // pred_fallthru
      _
    // Predicated region
    $region34: #{tpu_custom_call.1} parent=1 // pred_check
      _
    $region35: #{tpu_custom_call.1} parent=1 // pred_check_branch
      %140 = sbr.rel (0) target = $region37
    $region36: #{tpu_custom_call.1} parent=1 // pred_region
      %142 = vsyncadd [#allocation5], 0
      %s144 = sshll.u32 [#allocation6], 4
      %s145 = int_to_ptr.vmem [resolvable:$true] %s144
      %s146 = sshll.u32 %s5, 4
      %s147 = int_to_ptr.hbm [resolvable:$true] %s146
      %149 = dma.vmem_to_hbm [thread:$0]  %s145, 32, %s147, [#allocation5]
    $region37: #{tpu_custom_call.1} parent=1 // pred_fallthru
      _
    // Predicated region
    $region38: #{tpu_custom_call.1} parent=1 // pred_check
      _
    $region39: #{tpu_custom_call.1} parent=1 // pred_check_branch
      %151 = sbr.rel (0) target = $region41
    $region40: #{tpu_custom_call.1} parent=1 // pred_region
      %153 = dma.done [#allocation5], 32
    $region41: #{tpu_custom_call.1} parent=1 // pred_fallthru
      _
    %154 = vsyncpa [#allocation4], 1
    %155 = vsyncpa [#allocation5], 1

</llo_original>
